<compile_context>
chip_gen: v7x
topology: tpu7x:2x2x1
jax: 0.10.0
libtpu: 0.0.40
codegen_flags: <defaults>
</compile_context>

<pallas_src>
import functools
import math

import jax
import jax.numpy as jnp
from jax import lax
from jax.experimental import pallas as pl
from jax.experimental.pallas import tpu as pltpu


def _round_up(a, b):
    return ((a + b - 1) // b) * b


def _pad2(rows, cols):
    """Elements of a 2-D tile after (8, 128) layout padding."""
    return _round_up(rows, 8) * _round_up(cols, 128)


# ---------------------------------------------------------------------------
# Kernel. Grid = (num_m, num_h); hidden axis (j) is the reduction ("arbitrary").
#   x_ref     : (tile_m, C)               activations (original dtype, cast in-kernel)
#   wfc_ref   : (C, tile_h) or (C, H)     c_fc weight, pre-transposed, compute dtype
#   bfc_ref   : (1, tile_h) or (1, H)     c_fc bias (f32)
#   wproj_ref : (tile_h, C) or (H, C)     c_proj weight, pre-transposed, compute dtype
#   bproj_ref : (1, C)                    c_proj bias (f32)
#   o_ref     : (tile_m, C)               output tile (resident across j)
#   acc_ref   : (tile_m, C) f32           VMEM accumulator
# ---------------------------------------------------------------------------
def _mlp_kernel(x_ref, wfc_ref, bfc_ref, wproj_ref, bproj_ref, o_ref, acc_ref,
                *, tile_h, slice_weights, gelu_dtype):
    j = pl.program_id(1)

    # Fold c_proj bias into the accumulator init (init store happens anyway).
    @pl.when(j == 0)
    def _():
        acc_ref[...] = jnp.broadcast_to(
            bproj_ref[...].astype(jnp.float32), acc_ref.shape)

    if slice_weights:
        # Resident-weight mode: full weights live in VMEM; slice the hidden tile.
        off = j * tile_h
        if tile_h % 128 == 0:
            off = pl.multiple_of(off, 128)
        wfc = wfc_ref[:, pl.ds(off, tile_h)]        # (C, tile_h)
        bfc = bfc_ref[:, pl.ds(off, tile_h)]        # (1, tile_h)
        wproj = wproj_ref[pl.ds(off, tile_h), :]    # (tile_h, C)
    else:
        wfc = wfc_ref[...]
        bfc = bfc_ref[...]
        wproj = wproj_ref[...]

    # Cast the (resident) x tile to the MXU compute dtype in-kernel.
    x = x_ref[...].astype(wfc.dtype)

    # c_fc: (tile_m, C) @ (C, tile_h) -> f32   (canonical [M,K]@[K,N] contraction)
    h = jnp.dot(x, wfc, preferred_element_type=jnp.float32)
    h = h + bfc.astype(jnp.float32)

    # GELU, tanh approximation (bf16 on v6e/v7x keeps VPU/EUP cost low;
    # TODO(synk): pass gelu_dtype=jnp.float32 on v5e — no bf16 VPU/EUP there).
    h = h.astype(gelu_dtype)
    c0 = 0.7978845608028654  # sqrt(2/pi)
    h = 0.5 * h * (1.0 + jnp.tanh(c0 * (h + 0.044715 * (h * h * h))))

    # Partial c_proj: (tile_m, tile_h) @ (tile_h, C) -> f32, accumulate in VMEM.
    acc_ref[...] += jnp.dot(h.astype(wproj.dtype), wproj,
                            preferred_element_type=jnp.float32)

    @pl.when(j == pl.num_programs(1) - 1)
    def _():
        o_ref[...] = acc_ref[...].astype(o_ref.dtype)


# ---------------------------------------------------------------------------
# One-time parameter preparation (transpose + cast at init, NOT per call).
# Torch layout in: w_fc (H, C), b_fc (H,), w_proj (C, H), b_proj (C,).
# ---------------------------------------------------------------------------
def prepare_mlp_params(params, compute_dtype=jnp.bfloat16):
    w_fc, b_fc = params["w_fc"], params["b_fc"]
    w_proj, b_proj = params["w_proj"], params["b_proj"]
    H, C = w_fc.shape
    assert w_proj.shape == (C, H)
    return {
        "wfc_t": jnp.asarray(w_fc.T, dtype=compute_dtype),      # (C, H)
        "bfc": jnp.asarray(b_fc, jnp.float32).reshape(1, H),
        "wproj_t": jnp.asarray(w_proj.T, dtype=compute_dtype),  # (H, C)
        "bproj": jnp.asarray(b_proj, jnp.float32).reshape(1, C),
    }


# ---------------------------------------------------------------------------
# Wrapper
# ---------------------------------------------------------------------------
def pallas_mlp(x, prepared, *, tile_m=512, tile_h=512, weights_resident=None,
               gelu_dtype=None, out_dtype=None):
    wfc_t, bfc = prepared["wfc_t"], prepared["bfc"]
    wproj_t, bproj = prepared["wproj_t"], prepared["bproj"]
    compute_dtype = wfc_t.dtype
    if gelu_dtype is None:
        gelu_dtype = compute_dtype

    B, T, C = x.shape
    Cw, H = wfc_t.shape
    assert Cw == C and wproj_t.shape == (H, C)
    out_dtype = out_dtype or x.dtype

    M = B * T

    # --- tile_m: multiple of 8; keep num_m >= 2 so the "parallel" M axis can
    #     shard across v7x's two TensorCores.
    tile_m = max(8, min(tile_m, _round_up(M, 8)))
    tile_m = _round_up(tile_m, 8)
    if pl.cdiv(M, tile_m) < 2 and M >= 16:
        tile_m = _round_up(pl.cdiv(M, 2), 8)
    num_m = pl.cdiv(M, tile_m)
    Mp = num_m * tile_m

    # --- tile_h: a 128-multiple that divides H (avoid the tile_h = H blow-up).
    tile_h = min(tile_h, H)
    if H % tile_h != 0:
        th = (tile_h // 128) * 128
        while th >= 128 and H % th != 0:
            th -= 128
        tile_h = th if th >= 128 else H
    num_h = H // tile_h

    x2 = x.reshape(M, C)
    if Mp != M:
        x2 = jnp.pad(x2, ((0, Mp - M), (0, 0)))

    cb = jnp.dtype(compute_dtype).itemsize
    xb = jnp.dtype(x.dtype).itemsize
    ob = jnp.dtype(out_dtype).itemsize

    # VMEM accounting (double-buffered blocks + f32 accumulator).
    resident_w = _pad2(C, H) * cb + _pad2(H, C) * cb + _pad2(1, H) * 4
    tiled_w = _pad2(C, tile_h) * cb + _pad2(tile_h, C) * cb + _pad2(1, tile_h) * 4
    io_bytes = _pad2(tile_m, C) * xb + _pad2(tile_m, C) * ob + _pad2(1, C) * 4
    acc_bytes = _pad2(tile_m, C) * 4

    RESIDENT_BUDGET = 40 << 20  # leaves headroom on v7x's 64 MiB VMEM per core
    if weights_resident is None:
        weights_resident = (2 * (resident_w + io_bytes) + acc_bytes) <= RESIDENT_BUDGET

    if weights_resident:
        wfc_spec = pl.BlockSpec((C, H), lambda i, j: (0, 0))
        bfc_spec = pl.BlockSpec((1, H), lambda i, j: (0, 0))
        wproj_spec = pl.BlockSpec((H, C), lambda i, j: (0, 0))
        vmem_needed = 2 * (resident_w + io_bytes) + acc_bytes
    else:
        wfc_spec = pl.BlockSpec((C, tile_h), lambda i, j: (0, j))
        bfc_spec = pl.BlockSpec((1, tile_h), lambda i, j: (0, j))
        wproj_spec = pl.BlockSpec((tile_h, C), lambda i, j: (j, 0))
        vmem_needed = 2 * (tiled_w + io_bytes) + acc_bytes

    vmem_limit = int(min(max(vmem_needed + (1 << 20), 16 << 20), 64 << 20))

    weight_stream = 1 if weights_resident else num_m
    cost = pl.CostEstimate(
        flops=4 * Mp * C * H + 10 * Mp * H,
        transcendentals=Mp * H,
        bytes_accessed=int(Mp * C * xb + Mp * C * ob
                           + weight_stream * 2 * C * H * cb
                           + weight_stream * H * 4 + C * 4),
    )

    kernel = functools.partial(_mlp_kernel, tile_h=tile_h,
                               slice_weights=weights_resident,
                               gelu_dtype=gelu_dtype)

    out = pl.pallas_call(
        kernel,
        out_shape=jax.ShapeDtypeStruct((Mp, C), out_dtype),
        grid_spec=pltpu.PrefetchScalarGridSpec(
            num_scalar_prefetch=0,
            grid=(num_m, num_h),
            in_specs=[
                pl.BlockSpec((tile_m, C), lambda i, j: (i, 0)),  # x (resident over j)
                wfc_spec,                                        # c_fc weight
                bfc_spec,                                        # c_fc bias
                wproj_spec,                                      # c_proj weight
                pl.BlockSpec((1, C), lambda i, j: (0, 0)),       # c_proj bias
            ],
            out_specs=pl.BlockSpec((tile_m, C), lambda i, j: (i, 0)),
            scratch_shapes=[pltpu.VMEM((tile_m, C), jnp.float32)],
        ),
        compiler_params=pltpu.CompilerParams(
            dimension_semantics=("parallel", "arbitrary"),
            vmem_limit_bytes=vmem_limit,
        ),
        cost_estimate=cost,
    )(x2, wfc_t, bfc, wproj_t, bproj)

    return out[:M].reshape(B, T, C)


# ---------------------------------------------------------------------------
# Pure-JAX reference (f32, full precision)
# ---------------------------------------------------------------------------
def reference(x, params):
    h = jnp.einsum("btc,hc->bth", x, params["w_fc"],
                   precision=lax.Precision.HIGHEST) + params["b_fc"]
    c0 = math.sqrt(2.0 / math.pi)
    h = 0.5 * h * (1.0 + jnp.tanh(c0 * (h + 0.044715 * h ** 3)))
    return jnp.einsum("bth,ch->btc", h, params["w_proj"],
                      precision=lax.Precision.HIGHEST) + params["b_proj"]


if __name__ == "__main__":
    # Small config consistent with the module (n_embd -> 4*n_embd -> n_embd).
    # C is lane-dense (multiple of 128); B*T chosen so both the padding path
    # and the num_m >= 2 path are exercised.
    B, T, C = 2, 96, 128
    H = 4 * C

    key = jax.random.PRNGKey(0)
    kx, k1, k2, k3, k4 = jax.random.split(key, 5)

    # nn.Linear-style init: U(-1/sqrt(fan_in), 1/sqrt(fan_in)).
    b1 = 1.0 / math.sqrt(C)
    b2 = 1.0 / math.sqrt(H)
    params = {
        "w_fc": jax.random.uniform(k1, (H, C), jnp.float32, -b1, b1),
        "b_fc": jax.random.uniform(k2, (H,), jnp.float32, -b1, b1),
        "w_proj": jax.random.uniform(k3, (C, H), jnp.float32, -b2, b2),
        "b_proj": jax.random.uniform(k4, (C,), jnp.float32, -b2, b2),
    }
    x = jax.random.normal(kx, (B, T, C), jnp.float32)

    y_ref = reference(x, params)

    # 1) f32 compute, tiled weights, small tiles: exercises M padding (192 -> 256),
    #    the 4-step hidden-axis accumulation and the tiled-weight index maps.
    prep_f32 = prepare_mlp_params(params, compute_dtype=jnp.float32)
    y_f32 = pallas_mlp(x, prep_f32, tile_m=128, tile_h=128, weights_resident=False)
    y_f32 = jax.block_until_ready(y_f32)
    assert y_f32.shape == (B, T, C)
    err_f32 = float(jnp.max(jnp.abs(y_f32 - y_ref)))
    assert jnp.allclose(y_f32, y_ref, atol=1e-3, rtol=1e-3), f"f32 mismatch, max err {err_f32}"

    # 2) Production path: bf16 MXU operands + bf16 GELU, resident weights (auto),
    #    default tiles (auto-shrunk so num_m >= 2).
    prep_bf16 = prepare_mlp_params(params, compute_dtype=jnp.bfloat16)
    y_bf16 = pallas_mlp(x, prep_bf16)
    y_bf16 = jax.block_until_ready(y_bf16)
    assert y_bf16.shape == (B, T, C)
    err_bf16 = float(jnp.max(jnp.abs(y_bf16 - y_ref)))
    assert jnp.allclose(y_bf16, y_ref, atol=5e-2, rtol=5e-2), f"bf16 mismatch, max err {err_bf16}"

    print("KERNEL_OK")
</pallas_src>

<mosaic_0001>
module attributes {stable_mosaic.version = 11 : i64} {
  func.func @_mlp_kernel(%arg0: i32, %arg1: i32, %arg2: memref<128x128xf32, #tpu.memory_space<vmem>>, %arg3: memref<128x128xf32, #tpu.memory_space<vmem>>, %arg4: memref<1x128xf32, #tpu.memory_space<vmem>>, %arg5: memref<128x128xf32, #tpu.memory_space<vmem>>, %arg6: memref<1x128xf32, #tpu.memory_space<vmem>>, %arg7: memref<128x128xf32, #tpu.memory_space<vmem>>, %arg8: memref<128x128xf32, #tpu.memory_space<vmem>>) attributes {dimension_semantics = [#tpu.dimension_semantics<parallel>, #tpu.dimension_semantics<arbitrary>], iteration_bounds = array<i64: 2, 4>, scalar_prefetch = 0 : i64, scratch_operands = 1 : i64, tpu.core_type = #tpu.core_type<tc>, window_params = [{transform_indices = @transform_0, window_bounds = array<i64: 128, 128>}, {transform_indices = @transform_1, window_bounds = array<i64: 128, 128>}, {transform_indices = @transform_2, window_bounds = array<i64: 1, 128>}, {transform_indices = @transform_3, window_bounds = array<i64: 128, 128>}, {pipeline_mode = #tpu.pipeline_mode<synchronous>, transform_indices = @transform_4, window_bounds = array<i64: 1, 128>}, {transform_indices = @transform_5, window_bounds = array<i64: 128, 128>}]} {
    %c0_i32 = arith.constant 0 : i32
    %0 = arith.cmpi eq, %arg1, %c0_i32 : i32
    %1 = arith.extui %0 : i1 to i32
    %c0_i32_0 = arith.constant 0 : i32
    %2 = arith.cmpi ne, %1, %c0_i32_0 : i32
    scf.if %2 {
      %c0_18 = arith.constant 0 : index
      %c0_19 = arith.constant 0 : index
      %30 = vector.load %arg6[%c0_18, %c0_19] : memref<1x128xf32, #tpu.memory_space<vmem>>, vector<1x128xf32>
      %31 = vector.shape_cast %30 : vector<1x128xf32> to vector<1x128xf32>
      %32 = vector.broadcast %31 : vector<1x128xf32> to vector<128x128xf32>
      %c0_20 = arith.constant 0 : index
      %c0_21 = arith.constant 0 : index
      %33 = vector.load %arg8[%c0_20, %c0_21] : memref<128x128xf32, #tpu.memory_space<vmem>>, vector<128x128xf32>
      tpu.vector_store %arg8[%c0_20, %c0_21], %32 {strides = array<i32>} : memref<128x128xf32, #tpu.memory_space<vmem>>, vector<128x128xf32>,
    } else {
    }
    %c0 = arith.constant 0 : index
    %c0_1 = arith.constant 0 : index
    %3 = vector.load %arg3[%c0, %c0_1] : memref<128x128xf32, #tpu.memory_space<vmem>>, vector<128x128xf32>
    %c0_2 = arith.constant 0 : index
    %c0_3 = arith.constant 0 : index
    %4 = vector.load %arg4[%c0_2, %c0_3] : memref<1x128xf32, #tpu.memory_space<vmem>>, vector<1x128xf32>
    %c0_4 = arith.constant 0 : index
    %c0_5 = arith.constant 0 : index
    %5 = vector.load %arg5[%c0_4, %c0_5] : memref<128x128xf32, #tpu.memory_space<vmem>>, vector<128x128xf32>
    %c0_6 = arith.constant 0 : index
    %c0_7 = arith.constant 0 : index
    %6 = vector.load %arg2[%c0_6, %c0_7] : memref<128x128xf32, #tpu.memory_space<vmem>>, vector<128x128xf32>
    %cst = arith.constant dense<0.000000e+00> : vector<128x128xf32>
    %7 = tpu.matmul %6, %3, %cst {dimension_numbers = #tpu.dot_dimension_numbers<[1], [0], [0], [1], [0, 0, 1, 1], [], []>} : vector<128x128xf32>, vector<128x128xf32>, vector<128x128xf32> -> vector<128x128xf32>
    %8 = vector.broadcast %4 : vector<1x128xf32> to vector<128x128xf32>
    %9 = arith.addf %7, %8 : vector<128x128xf32>
    %cst_8 = arith.constant 5.000000e-01 : f32
    %10 = vector.broadcast %cst_8 : f32 to vector<128x128xf32>
    %11 = arith.mulf %10, %9 : vector<128x128xf32>
    %12 = arith.mulf %9, %9 : vector<128x128xf32>
    %13 = arith.mulf %12, %9 : vector<128x128xf32>
    %cst_9 = arith.constant 4.471500e-02 : f32
    %14 = vector.broadcast %cst_9 : f32 to vector<128x128xf32>
    %15 = arith.mulf %14, %13 : vector<128x128xf32>
    %16 = arith.addf %9, %15 : vector<128x128xf32>
    %cst_10 = arith.constant 0.797884583 : f32
    %17 = vector.broadcast %cst_10 : f32 to vector<128x128xf32>
    %18 = arith.mulf %17, %16 : vector<128x128xf32>
    %19 = math.tanh %18 : vector<128x128xf32>
    %cst_11 = arith.constant 1.000000e+00 : f32
    %20 = vector.broadcast %cst_11 : f32 to vector<128x128xf32>
    %21 = arith.addf %20, %19 : vector<128x128xf32>
    %22 = arith.mulf %11, %21 : vector<128x128xf32>
    %c0_12 = arith.constant 0 : index
    %c0_13 = arith.constant 0 : index
    %23 = vector.load %arg8[%c0_12, %c0_13] : memref<128x128xf32, #tpu.memory_space<vmem>>, vector<128x128xf32>
    %cst_14 = arith.constant dense<0.000000e+00> : vector<128x128xf32>
    %24 = tpu.matmul %22, %5, %cst_14 {dimension_numbers = #tpu.dot_dimension_numbers<[1], [0], [0], [1], [0, 0, 1, 1], [], []>} : vector<128x128xf32>, vector<128x128xf32>, vector<128x128xf32> -> vector<128x128xf32>
    %25 = arith.addf %23, %24 : vector<128x128xf32>
    %c0_15 = arith.constant 0 : index
    %c0_16 = arith.constant 0 : index
    %26 = vector.load %arg8[%c0_15, %c0_16] : memref<128x128xf32, #tpu.memory_space<vmem>>, vector<128x128xf32>
    tpu.vector_store %arg8[%c0_15, %c0_16], %25 {strides = array<i32>} : memref<128x128xf32, #tpu.memory_space<vmem>>, vector<128x128xf32>,
    %c3_i32 = arith.constant 3 : i32
    %27 = arith.cmpi eq, %arg1, %c3_i32 : i32
    %28 = arith.extui %27 : i1 to i32
    %c0_i32_17 = arith.constant 0 : i32
    %29 = arith.cmpi ne, %28, %c0_i32_17 : i32
    scf.if %29 {
      %c0_18 = arith.constant 0 : index
      %c0_19 = arith.constant 0 : index
      %30 = vector.load %arg8[%c0_18, %c0_19] : memref<128x128xf32, #tpu.memory_space<vmem>>, vector<128x128xf32>
      %c0_20 = arith.constant 0 : index
      %c0_21 = arith.constant 0 : index
      %31 = vector.load %arg7[%c0_20, %c0_21] : memref<128x128xf32, #tpu.memory_space<vmem>>, vector<128x128xf32>
      tpu.vector_store %arg7[%c0_20, %c0_21], %30 {strides = array<i32>} : memref<128x128xf32, #tpu.memory_space<vmem>>, vector<128x128xf32>,
    } else {
    }
    return
  }
  func.func @transform_0(%arg0: i32, %arg1: i32) -> (i32, i32) {
    %c0_i32 = arith.constant 0 : i32
    %c0_i32_0 = arith.constant 0 : i32
    return %arg0, %c0_i32 : i32, i32
  }
  func.func @transform_1(%arg0: i32, %arg1: i32) -> (i32, i32) {
    %c0_i32 = arith.constant 0 : i32
    %c0_i32_0 = arith.constant 0 : i32
    return %c0_i32, %arg1 : i32, i32
  }
  func.func @transform_2(%arg0: i32, %arg1: i32) -> (i32, i32) {
    %c0_i32 = arith.constant 0 : i32
    %c0_i32_0 = arith.constant 0 : i32
    return %c0_i32, %arg1 : i32, i32
  }
  func.func @transform_3(%arg0: i32, %arg1: i32) -> (i32, i32) {
    %c0_i32 = arith.constant 0 : i32
    %c0_i32_0 = arith.constant 0 : i32
    return %arg1, %c0_i32 : i32, i32
  }
  func.func @transform_4(%arg0: i32, %arg1: i32) -> (i32, i32) {
    %c0_i32 = arith.constant 0 : i32
    %c0_i32_0 = arith.constant 0 : i32
    %c0_i32_1 = arith.constant 0 : i32
    return %c0_i32, %c0_i32_0 : i32, i32
  }
  func.func @transform_5(%arg0: i32, %arg1: i32) -> (i32, i32) {
    %c0_i32 = arith.constant 0 : i32
    %c0_i32_0 = arith.constant 0 : i32
    return %arg0, %c0_i32 : i32, i32
  }
}

</mosaic_0001>

<llo_original>
// kernel: tpu_custom_call.1
$region0: #{tpu_custom_call.1}
  #allocation0 [shape = 'u32[]', space=smem, size = 0x4, offset = 0x4, fixed_abs, tag = 'smem constant byte address 0x4 - core index']
  #allocation1 [shape = 'u32[144,128]{1,0:T(1,128)}', space=vmem, size = 0x12000, scoped, tag = 'internal scratch']
  #allocation2 [shape = 'f32[128,128]{1,0:T(8,128)}', space=vmem, size = 0x10000, scoped, tag = 'scratch operand']
  %s0 = inlined_call_operand.hbm [shape: f32[256,128], index: 0, kind: input, shape index: {}]
  %s1 = inlined_call_operand.hbm [shape: f32[128,512], index: 1, kind: input, shape index: {}]
  %s2 = inlined_call_operand.vmem [shape: f32[1,512], index: 2, kind: input, shape index: {}]
  %s3 = inlined_call_operand.hbm [shape: f32[512,128], index: 3, kind: input, shape index: {}]
  %s4 = inlined_call_operand.vmem [shape: f32[1,128], index: 4, kind: input, shape index: {}]
  %s5 = inlined_call_operand.hbm [shape: f32[256,128], index: 5, kind: output, shape index: {}]
  %s6 = sld [smem:[#allocation0]]
  $region73: #{tpu_custom_call.1} parent=0
    _
  %s8 = ssub.s32 1, %s6
  %s9 = scalar_select 0, %s8, %s6
  $region1: #{tpu_custom_call.1} parent=0
    #allocation3 [shape = 'u8[131072]{0}', space=vmem, size = 0x20000, scoped, tag = 'input window, operand 0']
    #allocation4 [shape = 's32[2]{0}', space=sflag, size = 0x8, scoped, tag = 'scoped memory for tpu_custom_call.1']
    #allocation5 [shape = 's32[2]{0}', space=sflag, size = 0x8, scoped, tag = 'scoped memory for tpu_custom_call.1']
    #allocation6 [shape = 'u8[131072]{0}', space=vmem, size = 0x20000, scoped, tag = 'input window, operand 1']
    #allocation7 [shape = 's32[2]{0}', space=sflag, size = 0x8, scoped, tag = 'scoped memory for tpu_custom_call.1']
    #allocation8 [shape = 'u8[131072]{0}', space=vmem, size = 0x20000, scoped, tag = 'input window, operand 3']
    #allocation9 [shape = 'u8[131072]{0}', space=vmem, size = 0x20000, scoped, tag = 'output window, operand 0']
    %10 = vsyncpa [#allocation4], 0
    %s11 = scalar_lea.sflag [#allocation4], 1
    %12 = vsyncpa %s11, 0
    %13 = vsyncpa [#allocation7], 0
    %s14 = scalar_lea.sflag [#allocation7], 1
    %15 = vsyncpa %s14, 0
    %16 = vsyncpa [#allocation5], 0
    %s17 = scalar_lea.sflag [#allocation5], 1
    %18 = vsyncpa %s17, 0
    loop: start=0, step=1, limit=10
    $region2: #{tpu_custom_call.1} parent=1 // loop_pre_header
      _
    $region3: #{tpu_custom_call.1} parent=1 // loop_header
      %s20 = sphi 0, %s24
      %p21 = scmp.ge.s32.totalorder %s20, 10
      %s27 = sphi 0, %s39
      %s28 = sphi 0, %s35
      %s29 = sphi 0, %s27
      %s30 = sphi 0, %s28
      %s31 = sphi 0, %s29
      %s32 = sphi 0, %s30
      %s42 = sphi 0, %s44
      %s45 = sphi 0, %s42
      %s46 = sphi 0, %s45
      %s62 = sphi 0, %s46
      %s68 = sphi 0, %s70
      %s71 = sphi 0, %s68
      %s72 = sphi 0, %s71
      %s88 = sphi 0, %s72
      %s94 = sphi 0, %s96
      %s97 = sphi 0, %s94
      %s98 = sphi 0, %s97
      %s114 = sphi 0, %s98
      %s120 = sphi 0, %s122
      %s123 = sphi 0, %s120
      %s124 = sphi 0, %s123
      %s140 = sphi 0, %s124
      %s144 = sphi 0, %s144
      %s146 = sphi 0, %s144
      %s147 = sphi 0, %s146
      %s161 = sphi 0, %s147
      %s167 = sphi 0, %s169
      %s170 = sphi 0, %s167
      %s171 = sphi 0, %s170
      %s187 = sphi 0, %s171
    $region4: #{tpu_custom_call.1} parent=1 // loop_header_branch
      %23 = sbr.rel (%p21) target = $region8
    $region5: #{tpu_custom_call.1} parent=1 // loop_body
      %s25 = ssub.s32 %s20, 1
      %s26 = ssub.s32 %s20, 2
      %s33 = sadd.s32 1, %s28
      %p34 = scmp.ge.s32.totalorder %s33, 4
      %s35 = scalar_select %p34, 0, %s33
      %s36 = sadd.s32 1, %s27
      %s37 = scalar_select %p34, %s36, %s27
      %p38 = scmp.ge.s32.totalorder %s37, 2
      %s39 = scalar_select %p38, 0, %s37
      %s40 = ssub.s32 %s27, %s39
      %p41 = scmp.eq.s32.totalorder %s40, 0
      %s43 = sadd.s32 %s42, 1
      %s44 = scalar_select %p41, %s42, %s43
      %p47 = pneg %p41
      %p48 = scmp.eq.s32.totalorder %s20, 7
      %p49 = por %p47, %p48
      %p50 = scmp.ne.s32.totalorder %s42, %s45
      %p51 = scmp.eq.s32.totalorder %s20, 0
      %p52 = por %p50, %p51
      %p53 = scmp.ne.s32.totalorder %s42, %s45
      %p54 = scmp.eq.s32.totalorder %s25, 7
      %p55 = por %p53, %p54
      %p56 = scmp.ne.s32.totalorder %s45, %s46
      %p57 = scmp.eq.s32.totalorder %s25, 0
      %p58 = por %p56, %p57
      %p59 = scmp.ne.s32.totalorder %s45, %s46
      %p60 = scmp.eq.s32.totalorder %s26, 7
      %p61 = por %p59, %p60
      %p63 = scmp.ne.s32.totalorder %s46, %s62
      %p64 = scmp.eq.s32.totalorder %s26, 0
      %p65 = por %p63, %p64
      %s66 = ssub.s32 %s28, %s35
      %p67 = scmp.eq.s32.totalorder %s66, 0
      %s69 = sadd.s32 %s68, 1
      %s70 = scalar_select %p67, %s68, %s69
      %p73 = pneg %p67
      %p74 = scmp.eq.s32.totalorder %s20, 7
      %p75 = por %p73, %p74
      %p76 = scmp.ne.s32.totalorder %s68, %s71
      %p77 = scmp.eq.s32.totalorder %s20, 0
      %p78 = por %p76, %p77
      %p79 = scmp.ne.s32.totalorder %s68, %s71
      %p80 = scmp.eq.s32.totalorder %s25, 7
      %p81 = por %p79, %p80
      %p82 = scmp.ne.s32.totalorder %s71, %s72
      %p83 = scmp.eq.s32.totalorder %s25, 0
      %p84 = por %p82, %p83
      %p85 = scmp.ne.s32.totalorder %s71, %s72
      %p86 = scmp.eq.s32.totalorder %s26, 7
      %p87 = por %p85, %p86
      %p89 = scmp.ne.s32.totalorder %s72, %s88
      %p90 = scmp.eq.s32.totalorder %s26, 0
      %p91 = por %p89, %p90
      %s92 = ssub.s32 %s28, %s35
      %p93 = scmp.eq.s32.totalorder %s92, 0
      %s95 = sadd.s32 %s94, 1
      %s96 = scalar_select %p93, %s94, %s95
      %p99 = pneg %p93
      %p100 = scmp.eq.s32.totalorder %s20, 7
      %p101 = por %p99, %p100
      %p102 = scmp.ne.s32.totalorder %s94, %s97
      %p103 = scmp.eq.s32.totalorder %s20, 0
      %p104 = por %p102, %p103
      %p105 = scmp.ne.s32.totalorder %s94, %s97
      %p106 = scmp.eq.s32.totalorder %s25, 7
      %p107 = por %p105, %p106
      %p108 = scmp.ne.s32.totalorder %s97, %s98
      %p109 = scmp.eq.s32.totalorder %s25, 0
      %p110 = por %p108, %p109
      %p111 = scmp.ne.s32.totalorder %s97, %s98
      %p112 = scmp.eq.s32.totalorder %s26, 7
      %p113 = por %p111, %p112
      %p115 = scmp.ne.s32.totalorder %s98, %s114
      %p116 = scmp.eq.s32.totalorder %s26, 0
      %p117 = por %p115, %p116
      %s118 = ssub.s32 %s28, %s35
      %p119 = scmp.eq.s32.totalorder %s118, 0
      %s121 = sadd.s32 %s120, 1
      %s122 = scalar_select %p119, %s120, %s121
      %p125 = pneg %p119
      %p126 = scmp.eq.s32.totalorder %s20, 7
      %p127 = por %p125, %p126
      %p128 = scmp.ne.s32.totalorder %s120, %s123
      %p129 = scmp.eq.s32.totalorder %s20, 0
      %p130 = por %p128, %p129
      %p131 = scmp.ne.s32.totalorder %s120, %s123
      %p132 = scmp.eq.s32.totalorder %s25, 7
      %p133 = por %p131, %p132
      %p134 = scmp.ne.s32.totalorder %s123, %s124
      %p135 = scmp.eq.s32.totalorder %s25, 0
      %p136 = por %p134, %p135
      %p137 = scmp.ne.s32.totalorder %s123, %s124
      %p138 = scmp.eq.s32.totalorder %s26, 7
      %p139 = por %p137, %p138
      %p141 = scmp.ne.s32.totalorder %s124, %s140
      %p142 = scmp.eq.s32.totalorder %s26, 0
      %p143 = por %p141, %p142
      %s145 = sadd.s32 %s144, 1
      %p148 = scmp.eq.s32.totalorder %s20, 7
      %p149 = scmp.ne.s32.totalorder %s144, %s146
      %p150 = scmp.eq.s32.totalorder %s20, 0
      %p151 = por %p149, %p150
      %p152 = scmp.ne.s32.totalorder %s144, %s146
      %p153 = scmp.eq.s32.totalorder %s25, 7
      %p154 = por %p152, %p153
      %p155 = scmp.ne.s32.totalorder %s146, %s147
      %p156 = scmp.eq.s32.totalorder %s25, 0
      %p157 = por %p155, %p156
      %p158 = scmp.ne.s32.totalorder %s146, %s147
      %p159 = scmp.eq.s32.totalorder %s26, 7
      %p160 = por %p158, %p159
      %p162 = scmp.ne.s32.totalorder %s147, %s161
      %p163 = scmp.eq.s32.totalorder %s26, 0
      %p164 = por %p162, %p163
      %s165 = ssub.s32 %s27, %s39
      %p166 = scmp.eq.s32.totalorder %s165, 0
      %s168 = sadd.s32 %s167, 1
      %s169 = scalar_select %p166, %s167, %s168
      %p172 = pneg %p166
      %p173 = scmp.eq.s32.totalorder %s20, 7
      %p174 = por %p172, %p173
      %p175 = scmp.ne.s32.totalorder %s167, %s170
      %p176 = scmp.eq.s32.totalorder %s20, 0
      %p177 = por %p175, %p176
      %p178 = scmp.ne.s32.totalorder %s167, %s170
      %p179 = scmp.eq.s32.totalorder %s25, 7
      %p180 = por %p178, %p179
      %p181 = scmp.ne.s32.totalorder %s170, %s171
      %p182 = scmp.eq.s32.totalorder %s25, 0
      %p183 = por %p181, %p182
      %p184 = scmp.ne.s32.totalorder %s170, %s171
      %p185 = scmp.eq.s32.totalorder %s26, 7
      %p186 = por %p184, %p185
      %p188 = scmp.ne.s32.totalorder %s171, %s187
      %p189 = scmp.eq.s32.totalorder %s26, 0
      %p190 = por %p188, %p189
      %p191 = scmp.le.s32.totalorder 1, %s20
      %p192 = scmp.lt.s32.totalorder %s20, 9
      %p193 = pnand %p191, %p192
      %p194 = pneg %p193
      // Predicated region
      $region9: #{tpu_custom_call.1} parent=5 // pred_check
        _
      $region10: #{tpu_custom_call.1} parent=5 // pred_check_branch
        %196 = sbr.rel (%p193) target = $region12
      $region11: #{tpu_custom_call.1} parent=5 // pred_region
        %s197 = ssub.s32 %s20, 1
        // Predicated region
        $region13: #{tpu_custom_call.1} parent=11 // pred_check
          %p198 = pneg %p157
        $region14: #{tpu_custom_call.1} parent=11 // pred_check_branch
          %200 = sbr.rel (%p198) target = $region16
        $region15: #{tpu_custom_call.1} parent=11 // pred_region
          _
        $region16: #{tpu_custom_call.1} parent=11 // pred_fallthru
          _
      $region12: #{tpu_custom_call.1} parent=5 // pred_fallthru
        _
      %p201 = scmp.lt.s32.totalorder %s20, 8
      // Predicated region
      $region17: #{tpu_custom_call.1} parent=5 // pred_check
        %p202 = pneg %p201
      $region18: #{tpu_custom_call.1} parent=5 // pred_check_branch
        %204 = sbr.rel (%p202) target = $region20
      $region19: #{tpu_custom_call.1} parent=5 // pred_region
        // Predicated region
        $region21: #{tpu_custom_call.1} parent=19 // pred_check
          %p205 = pneg %p52
        $region22: #{tpu_custom_call.1} parent=19 // pred_check_branch
          %207 = sbr.rel (%p205) target = $region24
        $region23: #{tpu_custom_call.1} parent=19 // pred_region
          %s208 = sand.u32 %s42, 1
          %s209 = scalar_lea.sflag [#allocation4], %s208
          %s210 = sand.u32 %s42, 1
          %s211 = smul.addr %s210, 128
          %s212 = scalar_lea.vmem [#allocation3], %s211
          %s213 = smul.u32 16, %s27
          %s215 = ssub.s32 2048, 2048
          %216 = vsyncadd %s209, %s215
          %s217 = smul.addr %s213, 128
          %s218 = scalar_lea.hbm %s0, %s217
          %s219 = sshll.u32 %s212, 4
          %s220 = int_to_ptr.vmem [resolvable:$true] %s219
          %225 = dma.hbm_to_vmem [thread:$0]  %s218, 2048, %s220, %s209, 128, 128, 8
        $region24: #{tpu_custom_call.1} parent=19 // pred_fallthru
          _
        // Predicated region
        $region25: #{tpu_custom_call.1} parent=19 // pred_check
          %p226 = pneg %p78
        $region26: #{tpu_custom_call.1} parent=19 // pred_check_branch
          %228 = sbr.rel (%p226) target = $region28
        $region27: #{tpu_custom_call.1} parent=19 // pred_region
          %s229 = sand.u32 %s20, 1
          %s230 = scalar_lea.sflag [#allocation7], %s229
          %s231 = sand.u32 %s68, 1
          %s232 = smul.addr %s231, 128
          %s233 = scalar_lea.vmem [#allocation6], %s232
          %s235 = ssub.s32 2048, 2048
          %236 = vsyncadd %s230, %s235
          %s237 = smul.addr %s28, 128
          %s238 = scalar_lea.hbm %s1, %s237
          %s239 = sshll.u32 %s233, 4
          %s240 = int_to_ptr.vmem [resolvable:$true] %s239
          %245 = dma.hbm_to_vmem [thread:$0]  %s238, 2048, %s240, %s230, 512, 128, 8
        $region28: #{tpu_custom_call.1} parent=19 // pred_fallthru
          _
        // Predicated region
        $region29: #{tpu_custom_call.1} parent=19 // pred_check
          %p246 = pneg %p104
        $region30: #{tpu_custom_call.1} parent=19 // pred_check_branch
          %248 = sbr.rel (%p246) target = $region32
        $region31: #{tpu_custom_call.1} parent=19 // pred_region
          %p249 = scmp.lt.s32.totalorder %s28, 3
          %s250 = scalar_select %p249, %s28, 3
          %s251 = scalar_lea.vmem %s2, %s250
        $region32: #{tpu_custom_call.1} parent=19 // pred_fallthru
          _
        // Predicated region
        $region33: #{tpu_custom_call.1} parent=19 // pred_check
          %p252 = pneg %p130
        $region34: #{tpu_custom_call.1} parent=19 // pred_check_branch
          %254 = sbr.rel (%p252) target = $region36
        $region35: #{tpu_custom_call.1} parent=19 // pred_region
          %s255 = sand.u32 %s20, 1
          %s256 = scalar_lea.sflag [#allocation7], %s255
          %s257 = sand.u32 %s120, 1
          %s258 = smul.addr %s257, 128
          %s259 = scalar_lea.vmem [#allocation8], %s258
          %s260 = smul.u32 16, %s28
          %s262 = ssub.s32 2048, 2048
          %263 = vsyncadd %s256, %s262
          %s264 = smul.addr %s260, 128
          %s265 = scalar_lea.hbm %s3, %s264
          %s266 = sshll.u32 %s259, 4
          %s267 = int_to_ptr.vmem [resolvable:$true] %s266
          %272 = dma.hbm_to_vmem [thread:$0]  %s265, 2048, %s267, %s256, 128, 128, 8
        $region36: #{tpu_custom_call.1} parent=19 // pred_fallthru
          _
      $region20: #{tpu_custom_call.1} parent=5 // pred_fallthru
        _
      %p273 = scmp.le.s32.totalorder 1, %s20
      %p274 = scmp.lt.s32.totalorder %s20, 9
      %p275 = pnand %p273, %p274
      %p276 = pneg %p275
      // Predicated region
      $region37: #{tpu_custom_call.1} parent=5 // pred_check
        _
      $region38: #{tpu_custom_call.1} parent=5 // pred_check_branch
        %278 = sbr.rel (%p275) target = $region40
      $region39: #{tpu_custom_call.1} parent=5 // pred_region
        %s279 = ssub.s32 %s20, 1
        %s280 = sand.u32 %s45, 1
        %s281 = scalar_lea.sflag [#allocation4], %s280
        %s282 = sand.u32 %s45, 1
        %s283 = smul.addr %s282, 128
        %s284 = scalar_lea.vmem [#allocation3], %s283
        // Predicated region
        $region41: #{tpu_custom_call.1} parent=39 // pred_check
          %p285 = pneg %p58
        $region42: #{tpu_custom_call.1} parent=39 // pred_check_branch
          %287 = sbr.rel (%p285) target = $region44
        $region43: #{tpu_custom_call.1} parent=39 // pred_region
          %288 = dma.done %s281, 2048
        $region44: #{tpu_custom_call.1} parent=39 // pred_fallthru
          _
        %s289 = sand.u32 %s25, 1
        %s290 = scalar_lea.sflag [#allocation7], %s289
        %s291 = sand.u32 %s71, 1
        %s292 = smul.addr %s291, 128
        %s293 = scalar_lea.vmem [#allocation6], %s292
        // Predicated region
        $region45: #{tpu_custom_call.1} parent=39 // pred_check
          %p294 = pneg %p84
        $region46: #{tpu_custom_call.1} parent=39 // pred_check_branch
          %296 = sbr.rel (%p294) target = $region48
        $region47: #{tpu_custom_call.1} parent=39 // pred_region
          %297 = dma.done %s290, 2048
        $region48: #{tpu_custom_call.1} parent=39 // pred_fallthru
          _
        %s298 = sand.u32 %s25, 1
        %s299 = scalar_lea.sflag [#allocation7], %s298
        %s300 = sand.u32 %s123, 1
        %s301 = smul.addr %s300, 128
        %s302 = scalar_lea.vmem [#allocation8], %s301
        // Predicated region
        $region49: #{tpu_custom_call.1} parent=39 // pred_check
          %p303 = pneg %p136
        $region50: #{tpu_custom_call.1} parent=39 // pred_check_branch
          %305 = sbr.rel (%p303) target = $region52
        $region51: #{tpu_custom_call.1} parent=39 // pred_region
          %306 = dma.done %s299, 2048
        $region52: #{tpu_custom_call.1} parent=39 // pred_fallthru
          _
        %s307 = sand.u32 %s45, 1
        %s308 = scalar_lea.sflag [#allocation4], %s307
        %s309 = sand.u32 %s45, 1
        %s310 = smul.addr %s309, 128
        %s311 = scalar_lea.vmem [#allocation3], %s310
        %p312 = pneg %p58
        %p313 = pneg %p55
        %s314 = sand.u32 %s25, 1
        %s315 = scalar_lea.sflag [#allocation7], %s314
        %s316 = sand.u32 %s71, 1
        %s317 = smul.addr %s316, 128
        %s318 = scalar_lea.vmem [#allocation6], %s317
        %p319 = pneg %p84
        %p320 = pneg %p81
        %p321 = scmp.lt.s32.totalorder %s30, 3
        %s322 = scalar_select %p321, %s30, 3
        %s323 = scalar_lea.vmem %s2, %s322
        %p324 = pneg %p110
        %p325 = pneg %p107
        %s326 = sand.u32 %s25, 1
        %s327 = scalar_lea.sflag [#allocation7], %s326
        %s328 = sand.u32 %s123, 1
        %s329 = smul.addr %s328, 128
        %s330 = scalar_lea.vmem [#allocation8], %s329
        %p331 = pneg %p136
        %p332 = pneg %p133
        %p333 = pneg %p157
        %p334 = pneg %p154
        %p335 = pneg %p183
        %p336 = pneg %p180
        %s337 = sand.u32 %s170, 1
        %s338 = scalar_lea.sflag [#allocation5], %s337
        %s339 = sand.u32 %s170, 1
        %s340 = smul.addr %s339, 128
        %s341 = scalar_lea.vmem [#allocation9], %s340
        %s342 = smul.u32 16, %s29
        %p343 = scmp.lt.s32.totalorder %s30, 3
        %s344 = scalar_select %p343, %s30, 3
        %s345 = scalar_lea.vmem %s2, %s344
        %s346 = smul.u32 16, %s30
        %s347 = smul.u32 16, %s29
        %p348 = scmp.eq.s32.totalorder %s30, 0
        // Predicated region
        $region53: #{tpu_custom_call.1} parent=39 // pred_check
          %p349 = pneg %p348
        $region54: #{tpu_custom_call.1} parent=39 // pred_check_branch
          %351 = sbr.rel (%p349) target = $region56
        $region55: #{tpu_custom_call.1} parent=39 // pred_region
          %v352 = vld [vmem:[%s4] sm:$0x1]
          %v354 = vlaneseq
          %v355 = vshrl.u32 %v354, 7
          %v356 = vsub.s32 0, %v355
          %v357 = vrot.slane %v352, %v356
          %359 = vst [vmem:[#allocation2] sm:$0xff] %v357
          %360 = vst [vmem:[#allocation2 + $0x8] sm:$0xff] %v357
          %361 = vst [vmem:[#allocation2 + $0x10] sm:$0xff] %v357
          %362 = vst [vmem:[#allocation2 + $0x18] sm:$0xff] %v357
          %363 = vst [vmem:[#allocation2 + $0x20] sm:$0xff] %v357
          %364 = vst [vmem:[#allocation2 + $0x28] sm:$0xff] %v357
          %365 = vst [vmem:[#allocation2 + $0x30] sm:$0xff] %v357
          %366 = vst [vmem:[#allocation2 + $0x38] sm:$0xff] %v357
          %367 = vst [vmem:[#allocation2 + $0x40] sm:$0xff] %v357
          %368 = vst [vmem:[#allocation2 + $0x48] sm:$0xff] %v357
          %369 = vst [vmem:[#allocation2 + $0x50] sm:$0xff] %v357
          %370 = vst [vmem:[#allocation2 + $0x58] sm:$0xff] %v357
          %371 = vst [vmem:[#allocation2 + $0x60] sm:$0xff] %v357
          %372 = vst [vmem:[#allocation2 + $0x68] sm:$0xff] %v357
          %373 = vst [vmem:[#allocation2 + $0x70] sm:$0xff] %v357
          %374 = vst [vmem:[#allocation2 + $0x78] sm:$0xff] %v357
        $region56: #{tpu_custom_call.1} parent=39 // pred_fallthru
          _
        %v375 = vld [vmem:[%s293] sm:$0xff]
        %v376 = vld [vmem:[%s293 + $0x8] sm:$0xff]
        %v377 = vld [vmem:[%s293 + $0x10] sm:$0xff]
        %v378 = vld [vmem:[%s293 + $0x18] sm:$0xff]
        %v379 = vld [vmem:[%s293 + $0x20] sm:$0xff]
        %v380 = vld [vmem:[%s293 + $0x28] sm:$0xff]
        %v381 = vld [vmem:[%s293 + $0x30] sm:$0xff]
        %v382 = vld [vmem:[%s293 + $0x38] sm:$0xff]
        %v383 = vld [vmem:[%s293 + $0x40] sm:$0xff]
        %v384 = vld [vmem:[%s293 + $0x48] sm:$0xff]
        %v385 = vld [vmem:[%s293 + $0x50] sm:$0xff]
        %v386 = vld [vmem:[%s293 + $0x58] sm:$0xff]
        %v387 = vld [vmem:[%s293 + $0x60] sm:$0xff]
        %v388 = vld [vmem:[%s293 + $0x68] sm:$0xff]
        %v389 = vld [vmem:[%s293 + $0x70] sm:$0xff]
        %v390 = vld [vmem:[%s293 + $0x78] sm:$0xff]
        %v391 = vld [vmem:[%s345] sm:$0x1]
        %v392 = vld [vmem:[%s302] sm:$0xff]
        %v393 = vld [vmem:[%s302 + $0x8] sm:$0xff]
        %v394 = vld [vmem:[%s302 + $0x10] sm:$0xff]
        %v395 = vld [vmem:[%s302 + $0x18] sm:$0xff]
        %v396 = vld [vmem:[%s302 + $0x20] sm:$0xff]
        %v397 = vld [vmem:[%s302 + $0x28] sm:$0xff]
        %v398 = vld [vmem:[%s302 + $0x30] sm:$0xff]
        %v399 = vld [vmem:[%s302 + $0x38] sm:$0xff]
        %v400 = vld [vmem:[%s302 + $0x40] sm:$0xff]
        %v401 = vld [vmem:[%s302 + $0x48] sm:$0xff]
        %v402 = vld [vmem:[%s302 + $0x50] sm:$0xff]
        %v403 = vld [vmem:[%s302 + $0x58] sm:$0xff]
        %v404 = vld [vmem:[%s302 + $0x60] sm:$0xff]
        %v405 = vld [vmem:[%s302 + $0x68] sm:$0xff]
        %v406 = vld [vmem:[%s302 + $0x70] sm:$0xff]
        %v407 = vld [vmem:[%s302 + $0x78] sm:$0xff]
        %v408 = vld [vmem:[%s284] sm:$0xff]
        %v409 = vld [vmem:[%s284 + $0x8] sm:$0xff]
        %v410 = vld [vmem:[%s284 + $0x10] sm:$0xff]
        %v411 = vld [vmem:[%s284 + $0x18] sm:$0xff]
        %v412 = vld [vmem:[%s284 + $0x20] sm:$0xff]
        %v413 = vld [vmem:[%s284 + $0x28] sm:$0xff]
        %v414 = vld [vmem:[%s284 + $0x30] sm:$0xff]
        %v415 = vld [vmem:[%s284 + $0x38] sm:$0xff]
        %v416 = vld [vmem:[%s284 + $0x40] sm:$0xff]
        %v417 = vld [vmem:[%s284 + $0x48] sm:$0xff]
        %v418 = vld [vmem:[%s284 + $0x50] sm:$0xff]
        %v419 = vld [vmem:[%s284 + $0x58] sm:$0xff]
        %v420 = vld [vmem:[%s284 + $0x60] sm:$0xff]
        %v421 = vld [vmem:[%s284 + $0x68] sm:$0xff]
        %v422 = vld [vmem:[%s284 + $0x70] sm:$0xff]
        %v423 = vld [vmem:[%s284 + $0x78] sm:$0xff]
        %v425 = vlaneseq
        %v426 = vshrl.u32 %v425, 7
        %v427 = vsub.s32 0, %v426
        %v428 = vrot.slane %v391, %v427
        %430 = vmatprep.subr.mxu0 0.0
        %431 = vmatpush1.msra.mxu0 %v375
        %432 = vmatprep.subr.mxu0 0.0
        %433 = vmatpush1.msra.mxu0 %v376
        %434 = vmatprep.subr.mxu0 0.0
        %435 = vmatpush1.msra.mxu0 %v377
        %436 = vmatprep.subr.mxu0 0.0
        %437 = vmatpush1.msra.mxu0 %v378
        %438 = vmatprep.subr.mxu0 0.0
        %439 = vmatpush1.msra.mxu0 %v379
        %440 = vmatprep.subr.mxu0 0.0
        %441 = vmatpush1.msra.mxu0 %v380
        %442 = vmatprep.subr.mxu0 0.0
        %443 = vmatpush1.msra.mxu0 %v381
        %444 = vmatprep.subr.mxu0 0.0
        %445 = vmatpush1.msra.mxu0 %v382
        %446 = vmatprep.subr.mxu0 0.0
        %447 = vmatpush1.msra.mxu0 %v383
        %448 = vmatprep.subr.mxu0 0.0
        %449 = vmatpush1.msra.mxu0 %v384
        %450 = vmatprep.subr.mxu0 0.0
        %451 = vmatpush1.msra.mxu0 %v385
        %452 = vmatprep.subr.mxu0 0.0
        %453 = vmatpush1.msra.mxu0 %v386
        %454 = vmatprep.subr.mxu0 0.0
        %455 = vmatpush1.msra.mxu0 %v387
        %456 = vmatprep.subr.mxu0 0.0
        %457 = vmatpush1.msra.mxu0 %v388
        %458 = vmatprep.subr.mxu0 0.0
        %459 = vmatpush1.msra.mxu0 %v389
        %460 = vmatprep.subr.mxu0 0.0
        %461 = vmatpush1.msra.mxu0 %v390
        %462 = vmatprep.subr.mxu0 0.0
        %463 = vmatpush1.msra.mxu0 0.0
        %464 = vmatprep.subr.mxu0 0.0
        %465 = vmatpush1.msra.mxu0 0.0
        %466 = vmatprep.subr.mxu0 0.0
        %467 = vmatpush1.msra.mxu0 0.0
        %468 = vmatprep.subr.mxu0 0.0
        %469 = vmatpush1.msra.mxu0 0.0
        %470 = vmatprep.subr.mxu0 0.0
        %471 = vmatpush1.msra.mxu0 0.0
        %472 = vmatprep.subr.mxu0 0.0
        %473 = vmatpush1.msra.mxu0 0.0
        %474 = vmatprep.subr.mxu0 0.0
        %475 = vmatpush1.msra.mxu0 0.0
        %476 = vmatprep.subr.mxu0 0.0
        %477 = vmatpush1.msra.mxu0 0.0
        %478 = vmatprep.subr.mxu0 0.0
        %479 = vmatpush1.msra.mxu0 0.0
        %480 = vmatprep.subr.mxu0 0.0
        %481 = vmatpush1.msra.mxu0 0.0
        %482 = vmatprep.subr.mxu0 0.0
        %483 = vmatpush1.msra.mxu0 0.0
        %484 = vmatprep.subr.mxu0 0.0
        %485 = vmatpush1.msra.mxu0 0.0
        %486 = vmatprep.subr.mxu0 0.0
        %487 = vmatpush1.msra.mxu0 0.0
        %488 = vmatprep.subr.mxu0 0.0
        %489 = vmatpush1.msra.mxu0 0.0
        %490 = vmatprep.subr.mxu0 0.0
        %491 = vmatpush1.msra.mxu0 0.0
        %492 = vmatprep.subr.mxu0 0.0
        %493 = vmatpush1.msra.mxu0 0.0
        %494 = vmatprep.mubr.f32.mxu0 0.0
        %495 = vmatmul.mubr.f32.gmra.mrb[0].mxu0 %v408
        %v496 = vpop.f32.mrb[0].mxu0
        %v497 = vadd.f32 %v428, %v496
        %v498 = vpop.f32.mrb[0].mxu0
        %499 = vmatprep.mubr.f32.mxu0 0.0
        %500 = vmatmul.mubr.f32.gmra.mrb[0].mxu0 %v409
        %v501 = vpop.f32.mrb[0].mxu0
        %v502 = vadd.f32 %v428, %v501
        %v503 = vpop.f32.mrb[0].mxu0
        %504 = vmatprep.mubr.f32.mxu0 0.0
        %505 = vmatmul.mubr.f32.gmra.mrb[0].mxu0 %v410
        %v506 = vpop.f32.mrb[0].mxu0
        %v507 = vadd.f32 %v428, %v506
        %v508 = vpop.f32.mrb[0].mxu0
        %509 = vmatprep.mubr.f32.mxu0 0.0
        %510 = vmatmul.mubr.f32.gmra.mrb[0].mxu0 %v411
        %v511 = vpop.f32.mrb[0].mxu0
        %v512 = vadd.f32 %v428, %v511
        %v513 = vpop.f32.mrb[0].mxu0
        %514 = vmatprep.mubr.f32.mxu0 0.0
        %515 = vmatmul.mubr.f32.gmra.mrb[0].mxu0 %v412
        %v516 = vpop.f32.mrb[0].mxu0
        %v517 = vadd.f32 %v428, %v516
        %v518 = vpop.f32.mrb[0].mxu0
        %519 = vmatprep.mubr.f32.mxu0 0.0
        %520 = vmatmul.mubr.f32.gmra.mrb[0].mxu0 %v413
        %v521 = vpop.f32.mrb[0].mxu0
        %v522 = vadd.f32 %v428, %v521
        %v523 = vpop.f32.mrb[0].mxu0
        %524 = vmatprep.mubr.f32.mxu0 0.0
        %525 = vmatmul.mubr.f32.gmra.mrb[0].mxu0 %v414
        %v526 = vpop.f32.mrb[0].mxu0
        %v527 = vadd.f32 %v428, %v526
        %v528 = vpop.f32.mrb[0].mxu0
        %529 = vmatprep.mubr.f32.mxu0 0.0
        %530 = vmatmul.mubr.f32.gmra.mrb[0].mxu0 %v415
        %v531 = vpop.f32.mrb[0].mxu0
        %v532 = vadd.f32 %v428, %v531
        %v533 = vpop.f32.mrb[0].mxu0
        %534 = vmatprep.mubr.f32.mxu0 0.0
        %535 = vmatmul.mubr.f32.gmra.mrb[0].mxu0 %v416
        %v536 = vpop.f32.mrb[0].mxu0
        %v537 = vadd.f32 %v428, %v536
        %v538 = vpop.f32.mrb[0].mxu0
        %539 = vmatprep.mubr.f32.mxu0 0.0
        %540 = vmatmul.mubr.f32.gmra.mrb[0].mxu0 %v417
        %v541 = vpop.f32.mrb[0].mxu0
        %v542 = vadd.f32 %v428, %v541
        %v543 = vpop.f32.mrb[0].mxu0
        %544 = vmatprep.mubr.f32.mxu0 0.0
        %545 = vmatmul.mubr.f32.gmra.mrb[0].mxu0 %v418
        %v546 = vpop.f32.mrb[0].mxu0
        %v547 = vadd.f32 %v428, %v546
        %v548 = vpop.f32.mrb[0].mxu0
        %549 = vmatprep.mubr.f32.mxu0 0.0
        %550 = vmatmul.mubr.f32.gmra.mrb[0].mxu0 %v419
        %v551 = vpop.f32.mrb[0].mxu0
        %v552 = vadd.f32 %v428, %v551
        %v553 = vpop.f32.mrb[0].mxu0
        %554 = vmatprep.mubr.f32.mxu0 0.0
        %555 = vmatmul.mubr.f32.gmra.mrb[0].mxu0 %v420
        %v556 = vpop.f32.mrb[0].mxu0
        %v557 = vadd.f32 %v428, %v556
        %v558 = vpop.f32.mrb[0].mxu0
        %559 = vmatprep.mubr.f32.mxu0 0.0
        %560 = vmatmul.mubr.f32.gmra.mrb[0].mxu0 %v421
        %v561 = vpop.f32.mrb[0].mxu0
        %v562 = vadd.f32 %v428, %v561
        %v563 = vpop.f32.mrb[0].mxu0
        %564 = vmatprep.mubr.f32.mxu0 0.0
        %565 = vmatmul.mubr.f32.gmra.mrb[0].mxu0 %v422
        %v566 = vpop.f32.mrb[0].mxu0
        %v567 = vadd.f32 %v428, %v566
        %v568 = vpop.f32.mrb[0].mxu0
        %569 = vmatprep.mubr.f32.mxu0 0.0
        %570 = vmatmul.mubr.f32.gmra.mrb[0].mxu0 %v423
        %v571 = vpop.f32.mrb[0].mxu0
        %v572 = vadd.f32 %v428, %v571
        %v573 = vpop.f32.mrb[0].mxu0
        %574 = vdwg.mxu0
        %v575 = vmul.f32 %v497, 0.5
        %v576 = vmul.f32 %v502, 0.5
        %v577 = vmul.f32 %v507, 0.5
        %v578 = vmul.f32 %v512, 0.5
        %v579 = vmul.f32 %v517, 0.5
        %v580 = vmul.f32 %v522, 0.5
        %v581 = vmul.f32 %v527, 0.5
        %v582 = vmul.f32 %v532, 0.5
        %v583 = vmul.f32 %v537, 0.5
        %v584 = vmul.f32 %v542, 0.5
        %v585 = vmul.f32 %v547, 0.5
        %v586 = vmul.f32 %v552, 0.5
        %v587 = vmul.f32 %v557, 0.5
        %v588 = vmul.f32 %v562, 0.5
        %v589 = vmul.f32 %v567, 0.5
        %v590 = vmul.f32 %v572, 0.5
        %v591 = vmul.f32 %v497, %v497
        %v592 = vmul.f32 %v502, %v502
        %v593 = vmul.f32 %v507, %v507
        %v594 = vmul.f32 %v512, %v512
        %v595 = vmul.f32 %v517, %v517
        %v596 = vmul.f32 %v522, %v522
        %v597 = vmul.f32 %v527, %v527
        %v598 = vmul.f32 %v532, %v532
        %v599 = vmul.f32 %v537, %v537
        %v600 = vmul.f32 %v542, %v542
        %v601 = vmul.f32 %v547, %v547
        %v602 = vmul.f32 %v552, %v552
        %v603 = vmul.f32 %v557, %v557
        %v604 = vmul.f32 %v562, %v562
        %v605 = vmul.f32 %v567, %v567
        %v606 = vmul.f32 %v572, %v572
        %v607 = vmul.f32 %v591, %v497
        %v608 = vmul.f32 %v592, %v502
        %v609 = vmul.f32 %v593, %v507
        %v610 = vmul.f32 %v594, %v512
        %v611 = vmul.f32 %v595, %v517
        %v612 = vmul.f32 %v596, %v522
        %v613 = vmul.f32 %v597, %v527
        %v614 = vmul.f32 %v598, %v532
        %v615 = vmul.f32 %v599, %v537
        %v616 = vmul.f32 %v600, %v542
        %v617 = vmul.f32 %v601, %v547
        %v618 = vmul.f32 %v602, %v552
        %v619 = vmul.f32 %v603, %v557
        %v620 = vmul.f32 %v604, %v562
        %v621 = vmul.f32 %v605, %v567
        %v622 = vmul.f32 %v606, %v572
        %v623 = vmul.f32 %v607, 0.044715
        %v624 = vmul.f32 %v608, 0.044715
        %v625 = vmul.f32 %v609, 0.044715
        %v626 = vmul.f32 %v610, 0.044715
        %v627 = vmul.f32 %v611, 0.044715
        %v628 = vmul.f32 %v612, 0.044715
        %v629 = vmul.f32 %v613, 0.044715
        %v630 = vmul.f32 %v614, 0.044715
        %v631 = vmul.f32 %v615, 0.044715
        %v632 = vmul.f32 %v616, 0.044715
        %v633 = vmul.f32 %v617, 0.044715
        %v634 = vmul.f32 %v618, 0.044715
        %v635 = vmul.f32 %v619, 0.044715
        %v636 = vmul.f32 %v620, 0.044715
        %v637 = vmul.f32 %v621, 0.044715
        %v638 = vmul.f32 %v622, 0.044715
        %v639 = vadd.f32 %v497, %v623
        %v640 = vadd.f32 %v502, %v624
        %v641 = vadd.f32 %v507, %v625
        %v642 = vadd.f32 %v512, %v626
        %v643 = vadd.f32 %v517, %v627
        %v644 = vadd.f32 %v522, %v628
        %v645 = vadd.f32 %v527, %v629
        %v646 = vadd.f32 %v532, %v630
        %v647 = vadd.f32 %v537, %v631
        %v648 = vadd.f32 %v542, %v632
        %v649 = vadd.f32 %v547, %v633
        %v650 = vadd.f32 %v552, %v634
        %v651 = vadd.f32 %v557, %v635
        %v652 = vadd.f32 %v562, %v636
        %v653 = vadd.f32 %v567, %v637
        %v654 = vadd.f32 %v572, %v638
        %v655 = vmul.f32 %v639, 0.7978846
        %v656 = vmul.f32 %v640, 0.7978846
        %v657 = vmul.f32 %v641, 0.7978846
        %v658 = vmul.f32 %v642, 0.7978846
        %v659 = vmul.f32 %v643, 0.7978846
        %v660 = vmul.f32 %v644, 0.7978846
        %v661 = vmul.f32 %v645, 0.7978846
        %v662 = vmul.f32 %v646, 0.7978846
        %v663 = vmul.f32 %v647, 0.7978846
        %v664 = vmul.f32 %v648, 0.7978846
        %v665 = vmul.f32 %v649, 0.7978846
        %v666 = vmul.f32 %v650, 0.7978846
        %v667 = vmul.f32 %v651, 0.7978846
        %v668 = vmul.f32 %v652, 0.7978846
        %v669 = vmul.f32 %v653, 0.7978846
        %v670 = vmul.f32 %v654, 0.7978846
        %v671 = vtanh.pop %v655
        %v672 = vtanh.pop %v656
        %v673 = vtanh.pop %v657
        %v674 = vtanh.pop %v658
        %v675 = vtanh.pop %v659
        %v676 = vtanh.pop %v660
        %v677 = vtanh.pop %v661
        %v678 = vtanh.pop %v662
        %v679 = vtanh.pop %v663
        %v680 = vtanh.pop %v664
        %v681 = vtanh.pop %v665
        %v682 = vtanh.pop %v666
        %v683 = vtanh.pop %v667
        %v684 = vtanh.pop %v668
        %v685 = vtanh.pop %v669
        %v686 = vtanh.pop %v670
        %v687 = vadd.f32 %v671, 1.0
        %v688 = vadd.f32 %v672, 1.0
        %v689 = vadd.f32 %v673, 1.0
        %v690 = vadd.f32 %v674, 1.0
        %v691 = vadd.f32 %v675, 1.0
        %v692 = vadd.f32 %v676, 1.0
        %v693 = vadd.f32 %v677, 1.0
        %v694 = vadd.f32 %v678, 1.0
        %v695 = vadd.f32 %v679, 1.0
        %v696 = vadd.f32 %v680, 1.0
        %v697 = vadd.f32 %v681, 1.0
        %v698 = vadd.f32 %v682, 1.0
        %v699 = vadd.f32 %v683, 1.0
        %v700 = vadd.f32 %v684, 1.0
        %v701 = vadd.f32 %v685, 1.0
        %v702 = vadd.f32 %v686, 1.0
        %v703 = vmul.f32 %v575, %v687
        %v704 = vmul.f32 %v576, %v688
        %v705 = vmul.f32 %v577, %v689
        %v706 = vmul.f32 %v578, %v690
        %v707 = vmul.f32 %v579, %v691
        %v708 = vmul.f32 %v580, %v692
        %v709 = vmul.f32 %v581, %v693
        %v710 = vmul.f32 %v582, %v694
        %v711 = vmul.f32 %v583, %v695
        %v712 = vmul.f32 %v584, %v696
        %v713 = vmul.f32 %v585, %v697
        %v714 = vmul.f32 %v586, %v698
        %v715 = vmul.f32 %v587, %v699
        %v716 = vmul.f32 %v588, %v700
        %v717 = vmul.f32 %v589, %v701
        %v718 = vmul.f32 %v590, %v702
        %v719 = vld [vmem:[#allocation2] sm:$0xff]
        %v720 = vld [vmem:[#allocation2 + $0x8] sm:$0xff]
        %v721 = vld [vmem:[#allocation2 + $0x10] sm:$0xff]
        %v722 = vld [vmem:[#allocation2 + $0x18] sm:$0xff]
        %v723 = vld [vmem:[#allocation2 + $0x20] sm:$0xff]
        %v724 = vld [vmem:[#allocation2 + $0x28] sm:$0xff]
        %v725 = vld [vmem:[#allocation2 + $0x30] sm:$0xff]
        %v726 = vld [vmem:[#allocation2 + $0x38] sm:$0xff]
        %v727 = vld [vmem:[#allocation2 + $0x40] sm:$0xff]
        %v728 = vld [vmem:[#allocation2 + $0x48] sm:$0xff]
        %v729 = vld [vmem:[#allocation2 + $0x50] sm:$0xff]
        %v730 = vld [vmem:[#allocation2 + $0x58] sm:$0xff]
        %v731 = vld [vmem:[#allocation2 + $0x60] sm:$0xff]
        %v732 = vld [vmem:[#allocation2 + $0x68] sm:$0xff]
        %v733 = vld [vmem:[#allocation2 + $0x70] sm:$0xff]
        %v734 = vld [vmem:[#allocation2 + $0x78] sm:$0xff]
        %735 = vmatprep.subr.mxu0 0.0
        %736 = vmatpush1.msra.mxu0 %v392
        %737 = vmatprep.subr.mxu0 0.0
        %738 = vmatpush1.msra.mxu0 %v393
        %739 = vmatprep.subr.mxu0 0.0
        %740 = vmatpush1.msra.mxu0 %v394
        %741 = vmatprep.subr.mxu0 0.0
        %742 = vmatpush1.msra.mxu0 %v395
        %743 = vmatprep.subr.mxu0 0.0
        %744 = vmatpush1.msra.mxu0 %v396
        %745 = vmatprep.subr.mxu0 0.0
        %746 = vmatpush1.msra.mxu0 %v397
        %747 = vmatprep.subr.mxu0 0.0
        %748 = vmatpush1.msra.mxu0 %v398
        %749 = vmatprep.subr.mxu0 0.0
        %750 = vmatpush1.msra.mxu0 %v399
        %751 = vmatprep.subr.mxu0 0.0
        %752 = vmatpush1.msra.mxu0 %v400
        %753 = vmatprep.subr.mxu0 0.0
        %754 = vmatpush1.msra.mxu0 %v401
        %755 = vmatprep.subr.mxu0 0.0
        %756 = vmatpush1.msra.mxu0 %v402
        %757 = vmatprep.subr.mxu0 0.0
        %758 = vmatpush1.msra.mxu0 %v403
        %759 = vmatprep.subr.mxu0 0.0
        %760 = vmatpush1.msra.mxu0 %v404
        %761 = vmatprep.subr.mxu0 0.0
        %762 = vmatpush1.msra.mxu0 %v405
        %763 = vmatprep.subr.mxu0 0.0
        %764 = vmatpush1.msra.mxu0 %v406
        %765 = vmatprep.subr.mxu0 0.0
        %766 = vmatpush1.msra.mxu0 %v407
        %767 = vmatprep.subr.mxu0 0.0
        %768 = vmatpush1.msra.mxu0 0.0
        %769 = vmatprep.subr.mxu0 0.0
        %770 = vmatpush1.msra.mxu0 0.0
        %771 = vmatprep.subr.mxu0 0.0
        %772 = vmatpush1.msra.mxu0 0.0
        %773 = vmatprep.subr.mxu0 0.0
        %774 = vmatpush1.msra.mxu0 0.0
        %775 = vmatprep.subr.mxu0 0.0
        %776 = vmatpush1.msra.mxu0 0.0
        %777 = vmatprep.subr.mxu0 0.0
        %778 = vmatpush1.msra.mxu0 0.0
        %779 = vmatprep.subr.mxu0 0.0
        %780 = vmatpush1.msra.mxu0 0.0
        %781 = vmatprep.subr.mxu0 0.0
        %782 = vmatpush1.msra.mxu0 0.0
        %783 = vmatprep.subr.mxu0 0.0
        %784 = vmatpush1.msra.mxu0 0.0
        %785 = vmatprep.subr.mxu0 0.0
        %786 = vmatpush1.msra.mxu0 0.0
        %787 = vmatprep.subr.mxu0 0.0
        %788 = vmatpush1.msra.mxu0 0.0
        %789 = vmatprep.subr.mxu0 0.0
        %790 = vmatpush1.msra.mxu0 0.0
        %791 = vmatprep.subr.mxu0 0.0
        %792 = vmatpush1.msra.mxu0 0.0
        %793 = vmatprep.subr.mxu0 0.0
        %794 = vmatpush1.msra.mxu0 0.0
        %795 = vmatprep.subr.mxu0 0.0
        %796 = vmatpush1.msra.mxu0 0.0
        %797 = vmatprep.subr.mxu0 0.0
        %798 = vmatpush1.msra.mxu0 0.0
        %799 = vmatprep.mubr.f32.mxu0 0.0
        %800 = vmatmul.mubr.f32.gmra.mrb[0].mxu0 %v703
        %v801 = vpop.f32.mrb[0].mxu0
        %v802 = vadd.f32 0.0, %v801
        %v803 = vpop.f32.mrb[0].mxu0
        %804 = vmatprep.mubr.f32.mxu0 0.0
        %805 = vmatmul.mubr.f32.gmra.mrb[0].mxu0 %v704
        %v806 = vpop.f32.mrb[0].mxu0
        %v807 = vadd.f32 0.0, %v806
        %v808 = vpop.f32.mrb[0].mxu0
        %809 = vmatprep.mubr.f32.mxu0 0.0
        %810 = vmatmul.mubr.f32.gmra.mrb[0].mxu0 %v705
        %v811 = vpop.f32.mrb[0].mxu0
        %v812 = vadd.f32 0.0, %v811
        %v813 = vpop.f32.mrb[0].mxu0
        %814 = vmatprep.mubr.f32.mxu0 0.0
        %815 = vmatmul.mubr.f32.gmra.mrb[0].mxu0 %v706
        %v816 = vpop.f32.mrb[0].mxu0
        %v817 = vadd.f32 0.0, %v816
        %v818 = vpop.f32.mrb[0].mxu0
        %819 = vmatprep.mubr.f32.mxu0 0.0
        %820 = vmatmul.mubr.f32.gmra.mrb[0].mxu0 %v707
        %v821 = vpop.f32.mrb[0].mxu0
        %v822 = vadd.f32 0.0, %v821
        %v823 = vpop.f32.mrb[0].mxu0
        %824 = vmatprep.mubr.f32.mxu0 0.0
        %825 = vmatmul.mubr.f32.gmra.mrb[0].mxu0 %v708
        %v826 = vpop.f32.mrb[0].mxu0
        %v827 = vadd.f32 0.0, %v826
        %v828 = vpop.f32.mrb[0].mxu0
        %829 = vmatprep.mubr.f32.mxu0 0.0
        %830 = vmatmul.mubr.f32.gmra.mrb[0].mxu0 %v709
        %v831 = vpop.f32.mrb[0].mxu0
        %v832 = vadd.f32 0.0, %v831
        %v833 = vpop.f32.mrb[0].mxu0
        %834 = vmatprep.mubr.f32.mxu0 0.0
        %835 = vmatmul.mubr.f32.gmra.mrb[0].mxu0 %v710
        %v836 = vpop.f32.mrb[0].mxu0
        %v837 = vadd.f32 0.0, %v836
        %v838 = vpop.f32.mrb[0].mxu0
        %839 = vmatprep.mubr.f32.mxu0 0.0
        %840 = vmatmul.mubr.f32.gmra.mrb[0].mxu0 %v711
        %v841 = vpop.f32.mrb[0].mxu0
        %v842 = vadd.f32 0.0, %v841
        %v843 = vpop.f32.mrb[0].mxu0
        %844 = vmatprep.mubr.f32.mxu0 0.0
        %845 = vmatmul.mubr.f32.gmra.mrb[0].mxu0 %v712
        %v846 = vpop.f32.mrb[0].mxu0
        %v847 = vadd.f32 0.0, %v846
        %v848 = vpop.f32.mrb[0].mxu0
        %849 = vmatprep.mubr.f32.mxu0 0.0
        %850 = vmatmul.mubr.f32.gmra.mrb[0].mxu0 %v713
        %v851 = vpop.f32.mrb[0].mxu0
        %v852 = vadd.f32 0.0, %v851
        %v853 = vpop.f32.mrb[0].mxu0
        %854 = vmatprep.mubr.f32.mxu0 0.0
        %855 = vmatmul.mubr.f32.gmra.mrb[0].mxu0 %v714
        %v856 = vpop.f32.mrb[0].mxu0
        %v857 = vadd.f32 0.0, %v856
        %v858 = vpop.f32.mrb[0].mxu0
        %859 = vmatprep.mubr.f32.mxu0 0.0
        %860 = vmatmul.mubr.f32.gmra.mrb[0].mxu0 %v715
        %v861 = vpop.f32.mrb[0].mxu0
        %v862 = vadd.f32 0.0, %v861
        %v863 = vpop.f32.mrb[0].mxu0
        %864 = vmatprep.mubr.f32.mxu0 0.0
        %865 = vmatmul.mubr.f32.gmra.mrb[0].mxu0 %v716
        %v866 = vpop.f32.mrb[0].mxu0
        %v867 = vadd.f32 0.0, %v866
        %v868 = vpop.f32.mrb[0].mxu0
        %869 = vmatprep.mubr.f32.mxu0 0.0
        %870 = vmatmul.mubr.f32.gmra.mrb[0].mxu0 %v717
        %v871 = vpop.f32.mrb[0].mxu0
        %v872 = vadd.f32 0.0, %v871
        %v873 = vpop.f32.mrb[0].mxu0
        %874 = vmatprep.mubr.f32.mxu0 0.0
        %875 = vmatmul.mubr.f32.gmra.mrb[0].mxu0 %v718
        %v876 = vpop.f32.mrb[0].mxu0
        %v877 = vadd.f32 0.0, %v876
        %v878 = vpop.f32.mrb[0].mxu0
        %879 = vdwg.mxu0
        %v880 = vadd.f32 %v719, %v802
        %v881 = vadd.f32 %v720, %v807
        %v882 = vadd.f32 %v721, %v812
        %v883 = vadd.f32 %v722, %v817
        %v884 = vadd.f32 %v723, %v822
        %v885 = vadd.f32 %v724, %v827
        %v886 = vadd.f32 %v725, %v832
        %v887 = vadd.f32 %v726, %v837
        %v888 = vadd.f32 %v727, %v842
        %v889 = vadd.f32 %v728, %v847
        %v890 = vadd.f32 %v729, %v852
        %v891 = vadd.f32 %v730, %v857
        %v892 = vadd.f32 %v731, %v862
        %v893 = vadd.f32 %v732, %v867
        %v894 = vadd.f32 %v733, %v872
        %v895 = vadd.f32 %v734, %v877
        %896 = vst [vmem:[#allocation2] sm:$0xff] %v880
        %897 = vst [vmem:[#allocation2 + $0x8] sm:$0xff] %v881
        %898 = vst [vmem:[#allocation2 + $0x10] sm:$0xff] %v882
        %899 = vst [vmem:[#allocation2 + $0x18] sm:$0xff] %v883
        %900 = vst [vmem:[#allocation2 + $0x20] sm:$0xff] %v884
        %901 = vst [vmem:[#allocation2 + $0x28] sm:$0xff] %v885
        %902 = vst [vmem:[#allocation2 + $0x30] sm:$0xff] %v886
        %903 = vst [vmem:[#allocation2 + $0x38] sm:$0xff] %v887
        %904 = vst [vmem:[#allocation2 + $0x40] sm:$0xff] %v888
        %905 = vst [vmem:[#allocation2 + $0x48] sm:$0xff] %v889
        %906 = vst [vmem:[#allocation2 + $0x50] sm:$0xff] %v890
        %907 = vst [vmem:[#allocation2 + $0x58] sm:$0xff] %v891
        %908 = vst [vmem:[#allocation2 + $0x60] sm:$0xff] %v892
        %909 = vst [vmem:[#allocation2 + $0x68] sm:$0xff] %v893
        %910 = vst [vmem:[#allocation2 + $0x70] sm:$0xff] %v894
        %911 = vst [vmem:[#allocation2 + $0x78] sm:$0xff] %v895
        %p912 = scmp.eq.s32.totalorder %s30, 3
        // Predicated region
        $region57: #{tpu_custom_call.1} parent=39 // pred_check
          %p913 = pneg %p912
        $region58: #{tpu_custom_call.1} parent=39 // pred_check_branch
          %915 = sbr.rel (%p913) target = $region60
        $region59: #{tpu_custom_call.1} parent=39 // pred_region
          %v916 = vld [vmem:[#allocation2] sm:$0xff]
          %v917 = vld [vmem:[#allocation2 + $0x8] sm:$0xff]
          %v918 = vld [vmem:[#allocation2 + $0x10] sm:$0xff]
          %v919 = vld [vmem:[#allocation2 + $0x18] sm:$0xff]
          %v920 = vld [vmem:[#allocation2 + $0x20] sm:$0xff]
          %v921 = vld [vmem:[#allocation2 + $0x28] sm:$0xff]
          %v922 = vld [vmem:[#allocation2 + $0x30] sm:$0xff]
          %v923 = vld [vmem:[#allocation2 + $0x38] sm:$0xff]
          %v924 = vld [vmem:[#allocation2 + $0x40] sm:$0xff]
          %v925 = vld [vmem:[#allocation2 + $0x48] sm:$0xff]
          %v926 = vld [vmem:[#allocation2 + $0x50] sm:$0xff]
          %v927 = vld [vmem:[#allocation2 + $0x58] sm:$0xff]
          %v928 = vld [vmem:[#allocation2 + $0x60] sm:$0xff]
          %v929 = vld [vmem:[#allocation2 + $0x68] sm:$0xff]
          %v930 = vld [vmem:[#allocation2 + $0x70] sm:$0xff]
          %v931 = vld [vmem:[#allocation2 + $0x78] sm:$0xff]
          %932 = vst [vmem:[%s341] sm:$0xff] %v916
          %933 = vst [vmem:[%s341 + $0x8] sm:$0xff] %v917
          %934 = vst [vmem:[%s341 + $0x10] sm:$0xff] %v918
          %935 = vst [vmem:[%s341 + $0x18] sm:$0xff] %v919
          %936 = vst [vmem:[%s341 + $0x20] sm:$0xff] %v920
          %937 = vst [vmem:[%s341 + $0x28] sm:$0xff] %v921
          %938 = vst [vmem:[%s341 + $0x30] sm:$0xff] %v922
          %939 = vst [vmem:[%s341 + $0x38] sm:$0xff] %v923
          %940 = vst [vmem:[%s341 + $0x40] sm:$0xff] %v924
          %941 = vst [vmem:[%s341 + $0x48] sm:$0xff] %v925
          %942 = vst [vmem:[%s341 + $0x50] sm:$0xff] %v926
          %943 = vst [vmem:[%s341 + $0x58] sm:$0xff] %v927
          %944 = vst [vmem:[%s341 + $0x60] sm:$0xff] %v928
          %945 = vst [vmem:[%s341 + $0x68] sm:$0xff] %v929
          %946 = vst [vmem:[%s341 + $0x70] sm:$0xff] %v930
          %947 = vst [vmem:[%s341 + $0x78] sm:$0xff] %v931
        $region60: #{tpu_custom_call.1} parent=39 // pred_fallthru
          _
        %s948 = sand.u32 %s170, 1
        %s949 = scalar_lea.sflag [#allocation5], %s948
        %s950 = sand.u32 %s170, 1
        %s951 = smul.addr %s950, 128
        %s952 = scalar_lea.vmem [#allocation9], %s951
        // Predicated region
        $region61: #{tpu_custom_call.1} parent=39 // pred_check
          %p953 = pneg %p180
        $region62: #{tpu_custom_call.1} parent=39 // pred_check_branch
          %955 = sbr.rel (%p953) target = $region64
        $region63: #{tpu_custom_call.1} parent=39 // pred_region
          %s956 = smul.u32 16, %s29
          %s958 = ssub.s32 2048, 2048
          %959 = vsyncadd %s949, %s958
          %s960 = smul.addr %s956, 128
          %s961 = scalar_lea.hbm %s5, %s960
          %s962 = sshll.u32 %s952, 4
          %s963 = int_to_ptr.vmem [resolvable:$true] %s962
          %968 = dma.vmem_to_hbm [thread:$0]  %s963, 2048, %s961, %s949, 128, 128, 8
        $region64: #{tpu_custom_call.1} parent=39 // pred_fallthru
          _
      $region40: #{tpu_custom_call.1} parent=5 // pred_fallthru
        _
      %p969 = scmp.le.s32.totalorder 2, %s20
      // Predicated region
      $region65: #{tpu_custom_call.1} parent=5 // pred_check
        %p970 = pneg %p969
      $region66: #{tpu_custom_call.1} parent=5 // pred_check_branch
        %972 = sbr.rel (%p970) target = $region68
      $region67: #{tpu_custom_call.1} parent=5 // pred_region
        %s973 = ssub.s32 %s20, 2
        // Predicated region
        $region69: #{tpu_custom_call.1} parent=67 // pred_check
          %p974 = pneg %p186
        $region70: #{tpu_custom_call.1} parent=67 // pred_check_branch
          %976 = sbr.rel (%p974) target = $region72
        $region71: #{tpu_custom_call.1} parent=67 // pred_region
          %s977 = sand.u32 %s171, 1
          %s978 = scalar_lea.sflag [#allocation5], %s977
          %s979 = sand.u32 %s171, 1
          %s980 = smul.addr %s979, 128
          %s981 = scalar_lea.vmem [#allocation9], %s980
          %982 = dma.done %s978, 2048
        $region72: #{tpu_custom_call.1} parent=67 // pred_fallthru
          _
      $region68: #{tpu_custom_call.1} parent=5 // pred_fallthru
        _
    $region6: #{tpu_custom_call.1} parent=1 // loop_footer
      %s24 = sadd.s32 1, %s20
    $region7: #{tpu_custom_call.1} parent=1 // loop_footer_branch
      %19 = sbr.rel target = $region3
    $region8: #{tpu_custom_call.1} parent=1 // loop_exit
      _
    %983 = vsyncpa [#allocation4], 1
    %s984 = scalar_lea.sflag [#allocation4], 1
    %985 = vsyncpa %s984, 1
    %986 = vsyncpa [#allocation7], 1
    %s987 = scalar_lea.sflag [#allocation7], 1
    %988 = vsyncpa %s987, 1
    %989 = vsyncpa [#allocation5], 1
    %s990 = scalar_lea.sflag [#allocation5], 1
    %991 = vsyncpa %s990, 1

</llo_original>
